<compile_context>
chip_gen: v6e
topology: v6e:2x2x1
jax: 0.10.0
libtpu: 0.0.40
codegen_flags: <defaults>
</compile_context>

<pallas_src>
import math

import jax
import jax.numpy as jnp
from jax import lax
from jax.experimental import pallas as pl
from jax.experimental.pallas import tpu as pltpu

PAI = 3.1415926

# Octant thresholds in the module's own angle units (it scales by 180/PAI, not 180/pi):
# the rounding boundaries of round(theta * 180/PAI / 45) sit at theta = (22.5 + 45k) * PAI/180.
_T1 = math.tan(22.5 * PAI / 180.0)  # ~0.4142135
_T2 = math.tan(67.5 * PAI / 180.0)  # ~2.4142135


def _sobel_kernel(x_ref, up_ref, dn_ref, mag_ref, ori_ref):
    """One (batch b, row-tile r) grid step.

    x_ref : (3, TH, W)   RGB rows of this tile, native input dtype (cast in-kernel)
    up_ref: (3, HALO, W) the HALO image rows just above the tile (clamped at r == 0)
    dn_ref: (3, HALO, W) the HALO image rows just below the tile (clamped at r == last)
    mag_ref, ori_ref: (TH, W) float32
    """
    TH, W = mag_ref.shape
    HALO = up_ref.shape[1]

    r = pl.program_id(1)
    # Conv2d zero padding at the true image top/bottom: scale the halo row to zero.
    top_scale = (r > 0).astype(jnp.float32)
    bot_scale = (r < pl.num_programs(1) - 1).astype(jnp.float32)

    # Hoisted edge masks -- built once, reused by all 3 channels (JAX does not CSE
    # broadcast_in_dim, so keeping these out of the unrolled loop matters).
    row_idx = lax.broadcasted_iota(jnp.int32, (TH, 1), 0)
    is_first_row = row_idx == 0
    is_last_row = row_idx == TH - 1
    col_idx = lax.broadcasted_iota(jnp.int32, (1, W), 1)
    not_first_col = (col_idx != 0).astype(jnp.float32)      # zero at j == 0
    not_last_col = (col_idx != W - 1).astype(jnp.float32)   # zero at j == W-1

    mag_sum = jnp.zeros((TH, W), jnp.float32)
    gx_sum = jnp.zeros((TH, W), jnp.float32)
    gy_sum = jnp.zeros((TH, W), jnp.float32)

    for c in range(3):  # R, G, B -- short fixed trip count, keep unrolled
        # In-kernel cast: DMA moved the native dtype, compute happens in f32.
        ch = x_ref[c].astype(jnp.float32)                                   # (TH, W)
        top = up_ref[c, HALO - 1:HALO, :].astype(jnp.float32) * top_scale   # (1, W) row r*TH-1
        bot = dn_ref[c, 0:1, :].astype(jnp.float32) * bot_scale             # (1, W) row (r+1)*TH

        # Neighbour rows via XLU sublane rotation + halo-row select (no VMEM temps).
        # pltpu.roll == np.roll: roll(x, +1, 0)[i] = x[i-1]; roll(x, TH-1, 0)[i] = x[i+1].
        x_up = jnp.where(is_first_row, top, pltpu.roll(ch, shift=1, axis=0))       # x[i-1, j]
        x_dn = jnp.where(is_last_row, bot, pltpu.roll(ch, shift=TH - 1, axis=0))   # x[i+1, j]

        # Separable Sobel: vertical 3-tap pass ...
        a = x_up + 2.0 * ch + x_dn   # [1, 2, 1]   -> feeds SFH (gx)
        d = x_dn - x_up              # [-1, 0, 1]  -> feeds SFV (gy)

        # ... then the +/-1 horizontal taps as XLU lane rotations; the wrapped lane is
        # zeroed (Conv2d zero padding at the left/right image border).
        a_r = pltpu.roll(a, shift=W - 1, axis=1) * not_last_col    # a[i, j+1]
        a_l = pltpu.roll(a, shift=1, axis=1) * not_first_col       # a[i, j-1]
        d_r = pltpu.roll(d, shift=W - 1, axis=1) * not_last_col
        d_l = pltpu.roll(d, shift=1, axis=1) * not_first_col

        gx = a_r - a_l               # == conv3x3(x, SOBEL_H), padding=1
        gy = d_l + 2.0 * d + d_r     # == conv3x3(x, SOBEL_V), padding=1

        mag_sum = mag_sum + jnp.sqrt(gx * gx + gy * gy)
        gx_sum = gx_sum + gx
        gy_sum = gy_sum + gy

    # Orientation: atan2 + round-to-45deg collapsed into an octant compare/select
    # (no transcendental polynomial; EUP stays free for sqrt).
    ax = jnp.abs(gx_sum)
    ay = jnp.abs(gy_sum)
    base = jnp.where(ay <= _T1 * ax, 0.0,
                     jnp.where(ay >= _T2 * ax, 90.0, 45.0))
    sgn_y = jnp.where(gy_sum >= 0.0, 1.0, -1.0)
    ori = jnp.where(gx_sum >= 0.0, sgn_y * base, sgn_y * (180.0 - base))

    mag_ref[...] = mag_sum
    ori_ref[...] = ori


def _tpu_params(w_pad):
    """(generation, max row tile, vmem_limit_bytes) tuned per TPU generation."""
    kind = ""
    try:
        kind = jax.devices()[0].device_kind.lower()
    except Exception:
        pass
    if "v7" in kind or "7x" in kind:
        # 64 MiB physical VMEM on v7x: stay conservative, rely on 2-TC grid sharding.
        return 7, (256 if w_pad <= 1024 else 128), 48 * 1024 * 1024
    if "v6" in kind:
        return 6, 512, 100 * 1024 * 1024     # 128 MiB physical VMEM
    if "v5" in kind:
        return 5, 512, 100 * 1024 * 1024     # 128 MiB physical VMEM, lowest HBM BW
    return 0, 256, 48 * 1024 * 1024          # unknown backend: conservative defaults


def _max_rows_for_vmem(vmem_limit, w_pad, in_itemsize, sub):
    """Cap the row tile so the per-step working set fits comfortably in VMEM."""
    per_row = (2 * 3 * w_pad * in_itemsize      # double-buffered 3-channel input block
               + 2 * 2 * w_pad * 4              # double-buffered f32 mag/ori blocks
               + 8 * w_pad * 4)                 # live f32 temporaries / accumulators
    budget = int(vmem_limit * 0.6)              # headroom for halos / spills / sems
    rows = (budget // per_row) // sub * sub
    return max(sub, rows)


def _pick_row_tile(h_pad, sub, max_rows):
    """Largest multiple-of-`sub` divisor of h_pad that is <= max_rows (h_pad % sub == 0)."""
    max_rows = max(sub, (max_rows // sub) * sub)
    if h_pad <= max_rows:
        return h_pad
    th = max_rows
    while th > sub and h_pad % th != 0:
        th -= sub
    return th


def sobel_filter_net(img, *, row_tile=None):
    """Pallas TPU implementation of SobelFilterNet.forward.

    img: (N, C>=3, H, W); only channels 0..2 are used (like the torch module).
         dtype may be float32 / bfloat16 / float16 / uint8 / ... -- the cast to f32
         happens inside the kernel, after the DMA.
    Returns (grad_magnitude, grad_orientation), each (N, 1, H, W) float32.
    """
    N, C, H, W = img.shape
    if C < 3:
        raise ValueError("SobelFilterNet expects at least 3 channels (RGB)")
    if H < 1 or W < 1:
        raise ValueError("spatial dims must be >= 1")
    if jnp.dtype(img.dtype).itemsize > 4:       # e.g. float64 -> conv math is f32 anyway
        img = img.astype(jnp.float32)

    itemsize = jnp.dtype(img.dtype).itemsize
    sub = 8 * (4 // itemsize)                   # sublane alignment: 8 f32 / 16 bf16 / 32 int8
    HALO = sub

    # Lane-dense padding: an extra zero column/row is exactly Conv2d's zero padding,
    # so results for the real H x W window are bit-identical; padded rows/cols are
    # sliced off below. No-op (and zero extra HBM copies) when already aligned.
    W_pad = -(-W // 128) * 128
    H_pad = -(-H // sub) * sub
    if W_pad != W or H_pad != H:
        x_in = jnp.pad(img[:, 0:3], ((0, 0), (0, 0), (0, H_pad - H), (0, W_pad - W)))
    else:
        x_in = img  # channels 0..2 selected by the BlockSpec -> no wrapper slice copy

    gen, gen_max_rows, vmem_limit = _tpu_params(W_pad)
    max_rows = min(gen_max_rows, _max_rows_for_vmem(vmem_limit, W_pad, itemsize, sub))

    if row_tile is None:
        TH = _pick_row_tile(H_pad, sub, max_rows)
        if gen == 7:
            # Keep enough grid steps to feed both v7x TensorCores and the
            # double-buffered pipeline (best effort for small images).
            want_rt = min(max(1, -(-8 // N)), H_pad // sub)
            if H_pad // TH < want_rt:
                TH = _pick_row_tile(H_pad, sub, max(H_pad // want_rt, sub))
    else:
        TH = int(row_tile)
        if TH % sub != 0 or H_pad % TH != 0:
            raise ValueError(
                f"row_tile={TH} must be a multiple of {sub} and divide padded H={H_pad}")
    n_rt = H_pad // TH

    k = TH // HALO           # row-tile size measured in HALO-row blocks
    n_hb = H_pad // HALO     # number of HALO-row blocks along H

    def center_map(b, r):
        return (b, 0, r, 0)

    def halo_up_map(b, r):   # HALO-row block whose LAST row is r*TH - 1 (clamped at r == 0)
        return (b, 0, jnp.maximum(r * k - 1, 0), 0)

    def halo_dn_map(b, r):   # HALO-row block whose FIRST row is (r+1)*TH (clamped at r == last)
        return (b, 0, jnp.minimum((r + 1) * k, n_hb - 1), 0)

    out_shape = (
        jax.ShapeDtypeStruct((N, 1, H_pad, W_pad), jnp.float32),
        jax.ShapeDtypeStruct((N, 1, H_pad, W_pad), jnp.float32),
    )

    mag, ori = pl.pallas_call(
        _sobel_kernel,
        out_shape=out_shape,
        grid=(N, n_rt),
        in_specs=[
            # channels 0..2 selected by the BlockSpec; batch dim squeezed out
            pl.BlockSpec((None, 3, TH, W_pad), center_map),
            pl.BlockSpec((None, 3, HALO, W_pad), halo_up_map),
            pl.BlockSpec((None, 3, HALO, W_pad), halo_dn_map),
        ],
        out_specs=[
            pl.BlockSpec((None, None, TH, W_pad), center_map),
            pl.BlockSpec((None, None, TH, W_pad), center_map),
        ],
        compiler_params=pltpu.CompilerParams(
            dimension_semantics=("parallel", "parallel"),   # batch x row-tiles
            vmem_limit_bytes=vmem_limit,
        ),
    )(x_in, x_in, x_in)

    if W_pad != W or H_pad != H:
        mag = mag[:, :, :H, :W]
        ori = ori[:, :, :H, :W]
    return mag, ori


def sobel_filter_reference(img):
    """Pure-JAX oracle with the exact math of the torch module (testing only)."""
    x = img[:, 0:3].astype(jnp.float32)
    _, _, H, W = x.shape
    xp = jnp.pad(x, ((0, 0), (0, 0), (1, 1), (1, 1)))
    sob_h = jnp.array([[-1., 0., 1.], [-2., 0., 2.], [-1., 0., 1.]], jnp.float32)
    sob_v = sob_h.T

    def conv3(w):
        out = jnp.zeros_like(x)
        for di in range(3):
            for dj in range(3):
                out = out + w[di, dj] * xp[:, :, di:di + H, dj:dj + W]
        return out

    gx = conv3(sob_h)
    gy = conv3(sob_v)
    mag = jnp.sqrt(gx * gx + gy * gy).sum(axis=1, keepdims=True)
    ori = jnp.arctan2(gy.sum(axis=1, keepdims=True),
                      gx.sum(axis=1, keepdims=True)) * (180.0 / PAI)
    ori = jnp.round(ori / 45.0) * 45.0
    return mag, ori


if __name__ == "__main__":
    key = jax.random.PRNGKey(0)
    # small RGBA-style batch (extra channel ignored, exactly like the torch module), NCHW
    img = jax.random.uniform(key, (2, 4, 16, 16), dtype=jnp.float32)

    grad_magnitude, grad_orientation = sobel_filter_net(img)
    jax.block_until_ready((grad_magnitude, grad_orientation))
    assert grad_magnitude.shape == (2, 1, 16, 16)
    assert grad_orientation.shape == (2, 1, 16, 16)

    # numerical check against a pure-JAX oracle of the torch forward pass
    mag_ref, ori_ref = sobel_filter_reference(img)
    assert jnp.allclose(grad_magnitude, mag_ref, rtol=1e-4, atol=1e-3)
    assert jnp.allclose(grad_orientation, ori_ref, atol=1e-3)

    # exercise the multi-row-tile (halo / roll) path with a forced 8-row tile
    mag2, ori2 = sobel_filter_net(img, row_tile=8)
    jax.block_until_ready((mag2, ori2))
    assert jnp.allclose(mag2, mag_ref, rtol=1e-4, atol=1e-3)
    assert jnp.allclose(ori2, ori_ref, atol=1e-3)

    # exercise the in-kernel dtype-cast path (bf16 image, f32 math inside the kernel)
    img_bf16 = img.astype(jnp.bfloat16)
    mag3, ori3 = sobel_filter_net(img_bf16)
    jax.block_until_ready((mag3, ori3))
    mag_ref3, ori_ref3 = sobel_filter_reference(img_bf16)
    assert jnp.allclose(mag3, mag_ref3, rtol=1e-4, atol=1e-3)
    assert jnp.allclose(ori3, ori_ref3, atol=1e-3)

    print("KERNEL_OK")
</pallas_src>

<mosaic_0001>
module attributes {stable_mosaic.version = 11 : i64} {
  func.func @_sobel_kernel(%arg0: i32, %arg1: i32, %arg2: memref<1x3x16x128xf32, #tpu.memory_space<vmem>>, %arg3: memref<1x3x8x128xf32, #tpu.memory_space<vmem>>, %arg4: memref<1x3x8x128xf32, #tpu.memory_space<vmem>>, %arg5: memref<1x1x16x128xf32, #tpu.memory_space<vmem>>, %arg6: memref<1x1x16x128xf32, #tpu.memory_space<vmem>>) attributes {dimension_semantics = [#tpu.dimension_semantics<parallel>, #tpu.dimension_semantics<parallel>], iteration_bounds = array<i64: 2, 1>, scalar_prefetch = 0 : i64, scratch_operands = 0 : i64, tpu.core_type = #tpu.core_type<tc>, window_params = [{transform_indices = @transform_0, window_bounds = array<i64: 1, 3, 16, 128>}, {transform_indices = @transform_1, window_bounds = array<i64: 1, 3, 8, 128>}, {transform_indices = @transform_2, window_bounds = array<i64: 1, 3, 8, 128>}, {transform_indices = @transform_3, window_bounds = array<i64: 1, 1, 16, 128>}, {transform_indices = @transform_4, window_bounds = array<i64: 1, 1, 16, 128>}]} {
    %c0_i32 = arith.constant 0 : i32
    %0 = arith.cmpi sgt, %arg1, %c0_i32 : i32
    %1 = arith.extui %0 : i1 to i32
    %2 = arith.sitofp %1 : i32 to f32
    %c0_i32_0 = arith.constant 0 : i32
    %3 = arith.cmpi slt, %arg1, %c0_i32_0 : i32
    %4 = arith.extui %3 : i1 to i32
    %5 = arith.sitofp %4 : i32 to f32
    %6 = tpu.iota {dimensions = array<i32: 0>} : vector<16x1xi32>
    %c0_i32_1 = arith.constant 0 : i32
    %7 = vector.broadcast %c0_i32_1 : i32 to vector<16x1xi32>
    %8 = arith.cmpi eq, %6, %7 : vector<16x1xi32>
    %c15_i32 = arith.constant 15 : i32
    %9 = vector.broadcast %c15_i32 : i32 to vector<16x1xi32>
    %10 = arith.cmpi eq, %6, %9 : vector<16x1xi32>
    %11 = tpu.iota {dimensions = array<i32: 1>} : vector<1x128xi32>
    %c0_i32_2 = arith.constant 0 : i32
    %12 = vector.broadcast %c0_i32_2 : i32 to vector<1x128xi32>
    %13 = arith.cmpi ne, %11, %12 : vector<1x128xi32>
    %14 = arith.extui %13 : vector<1x128xi1> to vector<1x128xi32>
    %15 = arith.sitofp %14 : vector<1x128xi32> to vector<1x128xf32>
    %c127_i32 = arith.constant 127 : i32
    %16 = vector.broadcast %c127_i32 : i32 to vector<1x128xi32>
    %17 = arith.cmpi ne, %11, %16 : vector<1x128xi32>
    %18 = arith.extui %17 : vector<1x128xi1> to vector<1x128xi32>
    %19 = arith.sitofp %18 : vector<1x128xi32> to vector<1x128xf32>
    %cst = arith.constant 0.000000e+00 : f32
    %20 = vector.broadcast %cst : f32 to vector<16x128xf32>
    %cst_3 = arith.constant 0.000000e+00 : f32
    %21 = vector.broadcast %cst_3 : f32 to vector<16x128xf32>
    %cst_4 = arith.constant 0.000000e+00 : f32
    %22 = vector.broadcast %cst_4 : f32 to vector<16x128xf32>
    %c0 = arith.constant 0 : index
    %c0_5 = arith.constant 0 : index
    %c0_6 = arith.constant 0 : index
    %c0_7 = arith.constant 0 : index
    %23 = vector.load %arg2[%c0, %c0_5, %c0_6, %c0_7] : memref<1x3x16x128xf32, #tpu.memory_space<vmem>>, vector<1x1x16x128xf32>
    %24 = vector.shape_cast %23 : vector<1x1x16x128xf32> to vector<16x128xf32>
    %c0_8 = arith.constant 0 : index
    %c0_9 = arith.constant 0 : index
    %c7 = arith.constant 7 : index
    %c0_10 = arith.constant 0 : index
    %25 = vector.load %arg3[%c0_8, %c0_9, %c7, %c0_10] : memref<1x3x8x128xf32, #tpu.memory_space<vmem>>, vector<1x1x1x128xf32>
    %26 = vector.shape_cast %25 : vector<1x1x1x128xf32> to vector<1x128xf32>
    %27 = vector.broadcast %2 : f32 to vector<1x128xf32>
    %28 = arith.mulf %26, %27 : vector<1x128xf32>
    %c0_11 = arith.constant 0 : index
    %c0_12 = arith.constant 0 : index
    %c0_13 = arith.constant 0 : index
    %c0_14 = arith.constant 0 : index
    %29 = vector.load %arg4[%c0_11, %c0_12, %c0_13, %c0_14] : memref<1x3x8x128xf32, #tpu.memory_space<vmem>>, vector<1x1x1x128xf32>
    %30 = vector.shape_cast %29 : vector<1x1x1x128xf32> to vector<1x128xf32>
    %31 = vector.broadcast %5 : f32 to vector<1x128xf32>
    %32 = arith.mulf %30, %31 : vector<1x128xf32>
    %c1_i32 = arith.constant 1 : i32
    %33 = tpu.dynamic_rotate %24 by %c1_i32 dim 0 : vector<16x128xf32>, i32 -> vector<16x128xf32>
    %34 = vector.shape_cast %8 : vector<16x1xi1> to vector<16x1xi1>
    %35 = vector.broadcast %34 : vector<16x1xi1> to vector<16x128xi1>
    %36 = vector.shape_cast %28 : vector<1x128xf32> to vector<1x128xf32>
    %37 = vector.broadcast %36 : vector<1x128xf32> to vector<16x128xf32>
    %38 = arith.select %35, %37, %33 : vector<16x128xi1>, vector<16x128xf32>
    %c15_i32_15 = arith.constant 15 : i32
    %39 = tpu.dynamic_rotate %24 by %c15_i32_15 dim 0 : vector<16x128xf32>, i32 -> vector<16x128xf32>
    %40 = vector.shape_cast %10 : vector<16x1xi1> to vector<16x1xi1>
    %41 = vector.broadcast %40 : vector<16x1xi1> to vector<16x128xi1>
    %42 = vector.shape_cast %32 : vector<1x128xf32> to vector<1x128xf32>
    %43 = vector.broadcast %42 : vector<1x128xf32> to vector<16x128xf32>
    %44 = arith.select %41, %43, %39 : vector<16x128xi1>, vector<16x128xf32>
    %cst_16 = arith.constant 2.000000e+00 : f32
    %45 = vector.broadcast %cst_16 : f32 to vector<16x128xf32>
    %46 = arith.mulf %45, %24 : vector<16x128xf32>
    %47 = arith.addf %38, %46 : vector<16x128xf32>
    %48 = arith.addf %47, %44 : vector<16x128xf32>
    %49 = arith.subf %44, %38 : vector<16x128xf32>
    %c127_i32_17 = arith.constant 127 : i32
    %50 = tpu.dynamic_rotate %48 by %c127_i32_17 dim 1 : vector<16x128xf32>, i32 -> vector<16x128xf32>
    %51 = vector.broadcast %19 : vector<1x128xf32> to vector<16x128xf32>
    %52 = arith.mulf %50, %51 : vector<16x128xf32>
    %c1_i32_18 = arith.constant 1 : i32
    %53 = tpu.dynamic_rotate %48 by %c1_i32_18 dim 1 : vector<16x128xf32>, i32 -> vector<16x128xf32>
    %54 = vector.broadcast %15 : vector<1x128xf32> to vector<16x128xf32>
    %55 = arith.mulf %53, %54 : vector<16x128xf32>
    %c127_i32_19 = arith.constant 127 : i32
    %56 = tpu.dynamic_rotate %49 by %c127_i32_19 dim 1 : vector<16x128xf32>, i32 -> vector<16x128xf32>
    %57 = vector.broadcast %19 : vector<1x128xf32> to vector<16x128xf32>
    %58 = arith.mulf %56, %57 : vector<16x128xf32>
    %c1_i32_20 = arith.constant 1 : i32
    %59 = tpu.dynamic_rotate %49 by %c1_i32_20 dim 1 : vector<16x128xf32>, i32 -> vector<16x128xf32>
    %60 = vector.broadcast %15 : vector<1x128xf32> to vector<16x128xf32>
    %61 = arith.mulf %59, %60 : vector<16x128xf32>
    %62 = arith.subf %52, %55 : vector<16x128xf32>
    %cst_21 = arith.constant 2.000000e+00 : f32
    %63 = vector.broadcast %cst_21 : f32 to vector<16x128xf32>
    %64 = arith.mulf %63, %49 : vector<16x128xf32>
    %65 = arith.addf %61, %64 : vector<16x128xf32>
    %66 = arith.addf %65, %58 : vector<16x128xf32>
    %67 = arith.mulf %62, %62 : vector<16x128xf32>
    %68 = arith.mulf %66, %66 : vector<16x128xf32>
    %69 = arith.addf %67, %68 : vector<16x128xf32>
    %70 = math.sqrt %69 : vector<16x128xf32>
    %71 = arith.addf %20, %70 : vector<16x128xf32>
    %72 = arith.addf %21, %62 : vector<16x128xf32>
    %73 = arith.addf %22, %66 : vector<16x128xf32>
    %c0_22 = arith.constant 0 : index
    %c1 = arith.constant 1 : index
    %c0_23 = arith.constant 0 : index
    %c0_24 = arith.constant 0 : index
    %74 = vector.load %arg2[%c0_22, %c1, %c0_23, %c0_24] : memref<1x3x16x128xf32, #tpu.memory_space<vmem>>, vector<1x1x16x128xf32>
    %75 = vector.shape_cast %74 : vector<1x1x16x128xf32> to vector<16x128xf32>
    %c0_25 = arith.constant 0 : index
    %c1_26 = arith.constant 1 : index
    %c7_27 = arith.constant 7 : index
    %c0_28 = arith.constant 0 : index
    %76 = vector.load %arg3[%c0_25, %c1_26, %c7_27, %c0_28] : memref<1x3x8x128xf32, #tpu.memory_space<vmem>>, vector<1x1x1x128xf32>
    %77 = vector.shape_cast %76 : vector<1x1x1x128xf32> to vector<1x128xf32>
    %78 = vector.broadcast %2 : f32 to vector<1x128xf32>
    %79 = arith.mulf %77, %78 : vector<1x128xf32>
    %c0_29 = arith.constant 0 : index
    %c1_30 = arith.constant 1 : index
    %c0_31 = arith.constant 0 : index
    %c0_32 = arith.constant 0 : index
    %80 = vector.load %arg4[%c0_29, %c1_30, %c0_31, %c0_32] : memref<1x3x8x128xf32, #tpu.memory_space<vmem>>, vector<1x1x1x128xf32>
    %81 = vector.shape_cast %80 : vector<1x1x1x128xf32> to vector<1x128xf32>
    %82 = vector.broadcast %5 : f32 to vector<1x128xf32>
    %83 = arith.mulf %81, %82 : vector<1x128xf32>
    %c1_i32_33 = arith.constant 1 : i32
    %84 = tpu.dynamic_rotate %75 by %c1_i32_33 dim 0 : vector<16x128xf32>, i32 -> vector<16x128xf32>
    %85 = vector.shape_cast %8 : vector<16x1xi1> to vector<16x1xi1>
    %86 = vector.broadcast %85 : vector<16x1xi1> to vector<16x128xi1>
    %87 = vector.shape_cast %79 : vector<1x128xf32> to vector<1x128xf32>
    %88 = vector.broadcast %87 : vector<1x128xf32> to vector<16x128xf32>
    %89 = arith.select %86, %88, %84 : vector<16x128xi1>, vector<16x128xf32>
    %c15_i32_34 = arith.constant 15 : i32
    %90 = tpu.dynamic_rotate %75 by %c15_i32_34 dim 0 : vector<16x128xf32>, i32 -> vector<16x128xf32>
    %91 = vector.shape_cast %10 : vector<16x1xi1> to vector<16x1xi1>
    %92 = vector.broadcast %91 : vector<16x1xi1> to vector<16x128xi1>
    %93 = vector.shape_cast %83 : vector<1x128xf32> to vector<1x128xf32>
    %94 = vector.broadcast %93 : vector<1x128xf32> to vector<16x128xf32>
    %95 = arith.select %92, %94, %90 : vector<16x128xi1>, vector<16x128xf32>
    %cst_35 = arith.constant 2.000000e+00 : f32
    %96 = vector.broadcast %cst_35 : f32 to vector<16x128xf32>
    %97 = arith.mulf %96, %75 : vector<16x128xf32>
    %98 = arith.addf %89, %97 : vector<16x128xf32>
    %99 = arith.addf %98, %95 : vector<16x128xf32>
    %100 = arith.subf %95, %89 : vector<16x128xf32>
    %c127_i32_36 = arith.constant 127 : i32
    %101 = tpu.dynamic_rotate %99 by %c127_i32_36 dim 1 : vector<16x128xf32>, i32 -> vector<16x128xf32>
    %102 = vector.broadcast %19 : vector<1x128xf32> to vector<16x128xf32>
    %103 = arith.mulf %101, %102 : vector<16x128xf32>
    %c1_i32_37 = arith.constant 1 : i32
    %104 = tpu.dynamic_rotate %99 by %c1_i32_37 dim 1 : vector<16x128xf32>, i32 -> vector<16x128xf32>
    %105 = vector.broadcast %15 : vector<1x128xf32> to vector<16x128xf32>
    %106 = arith.mulf %104, %105 : vector<16x128xf32>
    %c127_i32_38 = arith.constant 127 : i32
    %107 = tpu.dynamic_rotate %100 by %c127_i32_38 dim 1 : vector<16x128xf32>, i32 -> vector<16x128xf32>
    %108 = vector.broadcast %19 : vector<1x128xf32> to vector<16x128xf32>
    %109 = arith.mulf %107, %108 : vector<16x128xf32>
    %c1_i32_39 = arith.constant 1 : i32
    %110 = tpu.dynamic_rotate %100 by %c1_i32_39 dim 1 : vector<16x128xf32>, i32 -> vector<16x128xf32>
    %111 = vector.broadcast %15 : vector<1x128xf32> to vector<16x128xf32>
    %112 = arith.mulf %110, %111 : vector<16x128xf32>
    %113 = arith.subf %103, %106 : vector<16x128xf32>
    %cst_40 = arith.constant 2.000000e+00 : f32
    %114 = vector.broadcast %cst_40 : f32 to vector<16x128xf32>
    %115 = arith.mulf %114, %100 : vector<16x128xf32>
    %116 = arith.addf %112, %115 : vector<16x128xf32>
    %117 = arith.addf %116, %109 : vector<16x128xf32>
    %118 = arith.mulf %113, %113 : vector<16x128xf32>
    %119 = arith.mulf %117, %117 : vector<16x128xf32>
    %120 = arith.addf %118, %119 : vector<16x128xf32>
    %121 = math.sqrt %120 : vector<16x128xf32>
    %122 = arith.addf %71, %121 : vector<16x128xf32>
    %123 = arith.addf %72, %113 : vector<16x128xf32>
    %124 = arith.addf %73, %117 : vector<16x128xf32>
    %c0_41 = arith.constant 0 : index
    %c2 = arith.constant 2 : index
    %c0_42 = arith.constant 0 : index
    %c0_43 = arith.constant 0 : index
    %125 = vector.load %arg2[%c0_41, %c2, %c0_42, %c0_43] : memref<1x3x16x128xf32, #tpu.memory_space<vmem>>, vector<1x1x16x128xf32>
    %126 = vector.shape_cast %125 : vector<1x1x16x128xf32> to vector<16x128xf32>
    %c0_44 = arith.constant 0 : index
    %c2_45 = arith.constant 2 : index
    %c7_46 = arith.constant 7 : index
    %c0_47 = arith.constant 0 : index
    %127 = vector.load %arg3[%c0_44, %c2_45, %c7_46, %c0_47] : memref<1x3x8x128xf32, #tpu.memory_space<vmem>>, vector<1x1x1x128xf32>
    %128 = vector.shape_cast %127 : vector<1x1x1x128xf32> to vector<1x128xf32>
    %129 = vector.broadcast %2 : f32 to vector<1x128xf32>
    %130 = arith.mulf %128, %129 : vector<1x128xf32>
    %c0_48 = arith.constant 0 : index
    %c2_49 = arith.constant 2 : index
    %c0_50 = arith.constant 0 : index
    %c0_51 = arith.constant 0 : index
    %131 = vector.load %arg4[%c0_48, %c2_49, %c0_50, %c0_51] : memref<1x3x8x128xf32, #tpu.memory_space<vmem>>, vector<1x1x1x128xf32>
    %132 = vector.shape_cast %131 : vector<1x1x1x128xf32> to vector<1x128xf32>
    %133 = vector.broadcast %5 : f32 to vector<1x128xf32>
    %134 = arith.mulf %132, %133 : vector<1x128xf32>
    %c1_i32_52 = arith.constant 1 : i32
    %135 = tpu.dynamic_rotate %126 by %c1_i32_52 dim 0 : vector<16x128xf32>, i32 -> vector<16x128xf32>
    %136 = vector.shape_cast %8 : vector<16x1xi1> to vector<16x1xi1>
    %137 = vector.broadcast %136 : vector<16x1xi1> to vector<16x128xi1>
    %138 = vector.shape_cast %130 : vector<1x128xf32> to vector<1x128xf32>
    %139 = vector.broadcast %138 : vector<1x128xf32> to vector<16x128xf32>
    %140 = arith.select %137, %139, %135 : vector<16x128xi1>, vector<16x128xf32>
    %c15_i32_53 = arith.constant 15 : i32
    %141 = tpu.dynamic_rotate %126 by %c15_i32_53 dim 0 : vector<16x128xf32>, i32 -> vector<16x128xf32>
    %142 = vector.shape_cast %10 : vector<16x1xi1> to vector<16x1xi1>
    %143 = vector.broadcast %142 : vector<16x1xi1> to vector<16x128xi1>
    %144 = vector.shape_cast %134 : vector<1x128xf32> to vector<1x128xf32>
    %145 = vector.broadcast %144 : vector<1x128xf32> to vector<16x128xf32>
    %146 = arith.select %143, %145, %141 : vector<16x128xi1>, vector<16x128xf32>
    %cst_54 = arith.constant 2.000000e+00 : f32
    %147 = vector.broadcast %cst_54 : f32 to vector<16x128xf32>
    %148 = arith.mulf %147, %126 : vector<16x128xf32>
    %149 = arith.addf %140, %148 : vector<16x128xf32>
    %150 = arith.addf %149, %146 : vector<16x128xf32>
    %151 = arith.subf %146, %140 : vector<16x128xf32>
    %c127_i32_55 = arith.constant 127 : i32
    %152 = tpu.dynamic_rotate %150 by %c127_i32_55 dim 1 : vector<16x128xf32>, i32 -> vector<16x128xf32>
    %153 = vector.broadcast %19 : vector<1x128xf32> to vector<16x128xf32>
    %154 = arith.mulf %152, %153 : vector<16x128xf32>
    %c1_i32_56 = arith.constant 1 : i32
    %155 = tpu.dynamic_rotate %150 by %c1_i32_56 dim 1 : vector<16x128xf32>, i32 -> vector<16x128xf32>
    %156 = vector.broadcast %15 : vector<1x128xf32> to vector<16x128xf32>
    %157 = arith.mulf %155, %156 : vector<16x128xf32>
    %c127_i32_57 = arith.constant 127 : i32
    %158 = tpu.dynamic_rotate %151 by %c127_i32_57 dim 1 : vector<16x128xf32>, i32 -> vector<16x128xf32>
    %159 = vector.broadcast %19 : vector<1x128xf32> to vector<16x128xf32>
    %160 = arith.mulf %158, %159 : vector<16x128xf32>
    %c1_i32_58 = arith.constant 1 : i32
    %161 = tpu.dynamic_rotate %151 by %c1_i32_58 dim 1 : vector<16x128xf32>, i32 -> vector<16x128xf32>
    %162 = vector.broadcast %15 : vector<1x128xf32> to vector<16x128xf32>
    %163 = arith.mulf %161, %162 : vector<16x128xf32>
    %164 = arith.subf %154, %157 : vector<16x128xf32>
    %cst_59 = arith.constant 2.000000e+00 : f32
    %165 = vector.broadcast %cst_59 : f32 to vector<16x128xf32>
    %166 = arith.mulf %165, %151 : vector<16x128xf32>
    %167 = arith.addf %163, %166 : vector<16x128xf32>
    %168 = arith.addf %167, %160 : vector<16x128xf32>
    %169 = arith.mulf %164, %164 : vector<16x128xf32>
    %170 = arith.mulf %168, %168 : vector<16x128xf32>
    %171 = arith.addf %169, %170 : vector<16x128xf32>
    %172 = math.sqrt %171 : vector<16x128xf32>
    %173 = arith.addf %122, %172 : vector<16x128xf32>
    %174 = arith.addf %123, %164 : vector<16x128xf32>
    %175 = arith.addf %124, %168 : vector<16x128xf32>
    %176 = math.absf %174 : vector<16x128xf32>
    %177 = math.absf %175 : vector<16x128xf32>
    %cst_60 = arith.constant 0.414213568 : f32
    %178 = vector.broadcast %cst_60 : f32 to vector<16x128xf32>
    %179 = arith.mulf %178, %176 : vector<16x128xf32>
    %180 = arith.cmpf ole, %177, %179 : vector<16x128xf32>
    %cst_61 = arith.constant 2.41421342 : f32
    %181 = vector.broadcast %cst_61 : f32 to vector<16x128xf32>
    %182 = arith.mulf %181, %176 : vector<16x128xf32>
    %183 = arith.cmpf oge, %177, %182 : vector<16x128xf32>
    %cst_62 = arith.constant 9.000000e+01 : f32
    %cst_63 = arith.constant 4.500000e+01 : f32
    %184 = vector.broadcast %cst_62 : f32 to vector<16x128xf32>
    %185 = vector.broadcast %cst_63 : f32 to vector<16x128xf32>
    %186 = arith.select %183, %184, %185 : vector<16x128xi1>, vector<16x128xf32>
    %cst_64 = arith.constant 0.000000e+00 : f32
    %187 = vector.broadcast %cst_64 : f32 to vector<16x128xf32>
    %188 = arith.select %180, %187, %186 : vector<16x128xi1>, vector<16x128xf32>
    %cst_65 = arith.constant 0.000000e+00 : f32
    %189 = vector.broadcast %cst_65 : f32 to vector<16x128xf32>
    %190 = arith.cmpf oge, %175, %189 : vector<16x128xf32>
    %cst_66 = arith.constant 1.000000e+00 : f32
    %cst_67 = arith.constant -1.000000e+00 : f32
    %191 = vector.broadcast %cst_66 : f32 to vector<16x128xf32>
    %192 = vector.broadcast %cst_67 : f32 to vector<16x128xf32>
    %193 = arith.select %190, %191, %192 : vector<16x128xi1>, vector<16x128xf32>
    %cst_68 = arith.constant 0.000000e+00 : f32
    %194 = vector.broadcast %cst_68 : f32 to vector<16x128xf32>
    %195 = arith.cmpf oge, %174, %194 : vector<16x128xf32>
    %196 = arith.mulf %193, %188 : vector<16x128xf32>
    %cst_69 = arith.constant 1.800000e+02 : f32
    %197 = vector.broadcast %cst_69 : f32 to vector<16x128xf32>
    %198 = arith.subf %197, %188 : vector<16x128xf32>
    %199 = arith.mulf %193, %198 : vector<16x128xf32>
    %200 = arith.select %195, %196, %199 : vector<16x128xi1>, vector<16x128xf32>
    %c0_70 = arith.constant 0 : index
    %c0_71 = arith.constant 0 : index
    %c0_72 = arith.constant 0 : index
    %c0_73 = arith.constant 0 : index
    %201 = vector.load %arg5[%c0_70, %c0_71, %c0_72, %c0_73] : memref<1x1x16x128xf32, #tpu.memory_space<vmem>>, vector<1x1x16x128xf32>
    %202 = vector.shape_cast %201 : vector<1x1x16x128xf32> to vector<16x128xf32>
    %203 = vector.shape_cast %173 : vector<16x128xf32> to vector<1x1x16x128xf32>
    tpu.vector_store %arg5[%c0_70, %c0_71, %c0_72, %c0_73], %203 {strides = array<i32>} : memref<1x1x16x128xf32, #tpu.memory_space<vmem>>, vector<1x1x16x128xf32>,
    %c0_74 = arith.constant 0 : index
    %c0_75 = arith.constant 0 : index
    %c0_76 = arith.constant 0 : index
    %c0_77 = arith.constant 0 : index
    %204 = vector.load %arg6[%c0_74, %c0_75, %c0_76, %c0_77] : memref<1x1x16x128xf32, #tpu.memory_space<vmem>>, vector<1x1x16x128xf32>
    %205 = vector.shape_cast %204 : vector<1x1x16x128xf32> to vector<16x128xf32>
    %206 = vector.shape_cast %200 : vector<16x128xf32> to vector<1x1x16x128xf32>
    tpu.vector_store %arg6[%c0_74, %c0_75, %c0_76, %c0_77], %206 {strides = array<i32>} : memref<1x1x16x128xf32, #tpu.memory_space<vmem>>, vector<1x1x16x128xf32>,
    return
  }
  func.func @transform_0(%arg0: i32, %arg1: i32) -> (i32, i32, i32, i32) {
    %c0_i32 = arith.constant 0 : i32
    %c0_i32_0 = arith.constant 0 : i32
    %c0_i32_1 = arith.constant 0 : i32
    return %arg0, %c0_i32, %arg1, %c0_i32_0 : i32, i32, i32, i32
  }
  func.func @transform_1(%arg0: i32, %arg1: i32) -> (i32, i32, i32, i32) {
    %c2_i32 = arith.constant 2 : i32
    %0 = arith.muli %arg1, %c2_i32 : i32
    %c1_i32 = arith.constant 1 : i32
    %1 = arith.subi %0, %c1_i32 : i32
    %c0_i32 = arith.constant 0 : i32
    %2 = arith.maxsi %1, %c0_i32 : i32
    %c0_i32_0 = arith.constant 0 : i32
    %c0_i32_1 = arith.constant 0 : i32
    %c0_i32_2 = arith.constant 0 : i32
    return %arg0, %c0_i32_0, %2, %c0_i32_1 : i32, i32, i32, i32
  }
  func.func @transform_2(%arg0: i32, %arg1: i32) -> (i32, i32, i32, i32) {
    %c1_i32 = arith.constant 1 : i32
    %0 = arith.addi %arg1, %c1_i32 : i32
    %c2_i32 = arith.constant 2 : i32
    %1 = arith.muli %0, %c2_i32 : i32
    %c1_i32_0 = arith.constant 1 : i32
    %2 = arith.minsi %1, %c1_i32_0 : i32
    %c0_i32 = arith.constant 0 : i32
    %c0_i32_1 = arith.constant 0 : i32
    %c0_i32_2 = arith.constant 0 : i32
    return %arg0, %c0_i32, %2, %c0_i32_1 : i32, i32, i32, i32
  }
  func.func @transform_3(%arg0: i32, %arg1: i32) -> (i32, i32, i32, i32) {
    %c0_i32 = arith.constant 0 : i32
    %c0_i32_0 = arith.constant 0 : i32
    %c0_i32_1 = arith.constant 0 : i32
    return %arg0, %c0_i32, %arg1, %c0_i32_0 : i32, i32, i32, i32
  }
  func.func @transform_4(%arg0: i32, %arg1: i32) -> (i32, i32, i32, i32) {
    %c0_i32 = arith.constant 0 : i32
    %c0_i32_0 = arith.constant 0 : i32
    %c0_i32_1 = arith.constant 0 : i32
    return %arg0, %c0_i32, %arg1, %c0_i32_0 : i32, i32, i32, i32
  }
}

</mosaic_0001>

<llo_original>
// kernel: tpu_custom_call.1
$region0: #{tpu_custom_call.1}
  #allocation0 [shape = 'u32[]', space=smem, size = 0x4, offset = 0x4, fixed_abs, tag = 'smem constant byte address 0x4 - core index']
  #allocation1 [shape = 'u32[144,128]{1,0:T(1,128)}', space=vmem, size = 0x12000, scoped, tag = 'internal scratch']
  %s0 = inlined_call_operand.hbm [shape: f32[2,3,16,128], index: 0, kind: input, shape index: {}]
  %s1 = inlined_call_operand.hbm [shape: f32[2,3,16,128], index: 1, kind: input, shape index: {}]
  %s2 = inlined_call_operand.hbm [shape: f32[2,3,16,128], index: 2, kind: input, shape index: {}]
  %s3 = inlined_call_operand.hbm [shape: f32[2,1,16,128], index: 3, kind: output, shape index: {0}]
  %s4 = inlined_call_operand.hbm [shape: f32[2,1,16,128], index: 4, kind: output, shape index: {1}]
  %5 = xla_tuple %s3, %s4
  %s6 = sld [smem:[#allocation0]]
  $region65: #{tpu_custom_call.1} parent=0
    _
  %s8 = ssub.s32 1, %s6
  %s9 = scalar_select 0, %s8, %s6
  $region1: #{tpu_custom_call.1} parent=0
    #allocation2 [shape = 'u8[49152]{0}', space=vmem, size = 0xc000, scoped, tag = 'input window, operand 0']
    #allocation3 [shape = 's32[2]{0}', space=sflag, size = 0x8, scoped, tag = 'scoped memory for tpu_custom_call.1']
    #allocation4 [shape = 's32[2]{0}', space=sflag, size = 0x8, scoped, tag = 'scoped memory for tpu_custom_call.1']
    #allocation5 [shape = 'u8[24576]{0}', space=vmem, size = 0x6000, scoped, tag = 'input window, operand 1']
    #allocation6 [shape = 's32[2]{0}', space=sflag, size = 0x8, scoped, tag = 'scoped memory for tpu_custom_call.1']
    #allocation7 [shape = 'u8[24576]{0}', space=vmem, size = 0x6000, scoped, tag = 'input window, operand 2']
    #allocation8 [shape = 'u8[16384]{0}', space=vmem, size = 0x4000, scoped, tag = 'output window, operand 0']
    #allocation9 [shape = 'u8[16384]{0}', space=vmem, size = 0x4000, scoped, tag = 'output window, operand 1']
    #allocation10 [shape = 's32[2]{0}', space=sflag, size = 0x8, scoped, tag = 'scoped memory for tpu_custom_call.1']
    %10 = vsyncpa [#allocation3], 0
    %s11 = scalar_lea.sflag [#allocation3], 1
    %12 = vsyncpa %s11, 0
    %13 = vsyncpa [#allocation6], 0
    %s14 = scalar_lea.sflag [#allocation6], 1
    %15 = vsyncpa %s14, 0
    %16 = vsyncpa [#allocation4], 0
    %s17 = scalar_lea.sflag [#allocation4], 1
    %18 = vsyncpa %s17, 0
    %19 = vsyncpa [#allocation10], 0
    %s20 = scalar_lea.sflag [#allocation10], 1
    %21 = vsyncpa %s20, 0
    loop: start=0, step=1, limit=4
    $region2: #{tpu_custom_call.1} parent=1 // loop_pre_header
      _
    $region3: #{tpu_custom_call.1} parent=1 // loop_header
      %s23 = sphi 0, %s27
      %p24 = scmp.ge.s32.totalorder %s23, 4
      %s30 = sphi 0, %s42
      %s31 = sphi 0, %s38
      %s32 = sphi 0, %s30
      %s33 = sphi 0, %s31
      %s34 = sphi 0, %s32
      %s35 = sphi 0, %s33
      %s47 = sphi 0, %s49
      %s50 = sphi 0, %s47
      %s51 = sphi 0, %s50
      %s67 = sphi 0, %s51
      %s83 = sphi 0, %s85
      %s86 = sphi 0, %s83
      %s87 = sphi 0, %s86
      %s103 = sphi 0, %s87
      %s119 = sphi 0, %s121
      %s122 = sphi 0, %s119
      %s123 = sphi 0, %s122
      %s139 = sphi 0, %s123
      %s147 = sphi 0, %s149
      %s150 = sphi 0, %s147
      %s151 = sphi 0, %s150
      %s167 = sphi 0, %s151
      %s175 = sphi 0, %s177
      %s178 = sphi 0, %s175
      %s179 = sphi 0, %s178
      %s195 = sphi 0, %s179
    $region4: #{tpu_custom_call.1} parent=1 // loop_header_branch
      %26 = sbr.rel (%p24) target = $region8
    $region5: #{tpu_custom_call.1} parent=1 // loop_body
      %s28 = ssub.s32 %s23, 1
      %s29 = ssub.s32 %s23, 2
      %s36 = sadd.s32 1, %s31
      %p37 = scmp.ge.s32.totalorder %s36, 1
      %s38 = scalar_select %p37, 0, %s36
      %s39 = sadd.s32 1, %s30
      %s40 = scalar_select %p37, %s39, %s30
      %p41 = scmp.ge.s32.totalorder %s40, 2
      %s42 = scalar_select %p41, 0, %s40
      %s43 = ssub.s32 %s30, %s42
      %s44 = ssub.s32 %s31, %s38
      %s45 = sor.u32 %s43, %s44
      %p46 = scmp.eq.s32.totalorder %s45, 0
      %s48 = sadd.s32 %s47, 1
      %s49 = scalar_select %p46, %s47, %s48
      %p52 = pneg %p46
      %p53 = scmp.eq.s32.totalorder %s23, 1
      %p54 = por %p52, %p53
      %p55 = scmp.ne.s32.totalorder %s47, %s50
      %p56 = scmp.eq.s32.totalorder %s23, 0
      %p57 = por %p55, %p56
      %p58 = scmp.ne.s32.totalorder %s47, %s50
      %p59 = scmp.eq.s32.totalorder %s28, 1
      %p60 = por %p58, %p59
      %p61 = scmp.ne.s32.totalorder %s50, %s51
      %p62 = scmp.eq.s32.totalorder %s28, 0
      %p63 = por %p61, %p62
      %p64 = scmp.ne.s32.totalorder %s50, %s51
      %p65 = scmp.eq.s32.totalorder %s29, 1
      %p66 = por %p64, %p65
      %p68 = scmp.ne.s32.totalorder %s51, %s67
      %p69 = scmp.eq.s32.totalorder %s29, 0
      %p70 = por %p68, %p69
      %s71 = smul.u32 %s31, 2
      %s72 = ssub.s32 %s71, 1
      %p73 = scmp.gt.s32.totalorder %s72, 0
      %s74 = scalar_select %p73, %s72, 0
      %s75 = smul.u32 %s38, 2
      %s76 = ssub.s32 %s75, 1
      %p77 = scmp.gt.s32.totalorder %s76, 0
      %s78 = scalar_select %p77, %s76, 0
      %s79 = ssub.s32 %s30, %s42
      %s80 = ssub.s32 %s74, %s78
      %s81 = sor.u32 %s79, %s80
      %p82 = scmp.eq.s32.totalorder %s81, 0
      %s84 = sadd.s32 %s83, 1
      %s85 = scalar_select %p82, %s83, %s84
      %p88 = pneg %p82
      %p89 = scmp.eq.s32.totalorder %s23, 1
      %p90 = por %p88, %p89
      %p91 = scmp.ne.s32.totalorder %s83, %s86
      %p92 = scmp.eq.s32.totalorder %s23, 0
      %p93 = por %p91, %p92
      %p94 = scmp.ne.s32.totalorder %s83, %s86
      %p95 = scmp.eq.s32.totalorder %s28, 1
      %p96 = por %p94, %p95
      %p97 = scmp.ne.s32.totalorder %s86, %s87
      %p98 = scmp.eq.s32.totalorder %s28, 0
      %p99 = por %p97, %p98
      %p100 = scmp.ne.s32.totalorder %s86, %s87
      %p101 = scmp.eq.s32.totalorder %s29, 1
      %p102 = por %p100, %p101
      %p104 = scmp.ne.s32.totalorder %s87, %s103
      %p105 = scmp.eq.s32.totalorder %s29, 0
      %p106 = por %p104, %p105
      %s107 = sadd.s32 %s31, 1
      %s108 = smul.u32 %s107, 2
      %p109 = scmp.lt.s32.totalorder %s108, 1
      %s110 = scalar_select %p109, %s108, 1
      %s111 = sadd.s32 %s38, 1
      %s112 = smul.u32 %s111, 2
      %p113 = scmp.lt.s32.totalorder %s112, 1
      %s114 = scalar_select %p113, %s112, 1
      %s115 = ssub.s32 %s30, %s42
      %s116 = ssub.s32 %s110, %s114
      %s117 = sor.u32 %s115, %s116
      %p118 = scmp.eq.s32.totalorder %s117, 0
      %s120 = sadd.s32 %s119, 1
      %s121 = scalar_select %p118, %s119, %s120
      %p124 = pneg %p118
      %p125 = scmp.eq.s32.totalorder %s23, 1
      %p126 = por %p124, %p125
      %p127 = scmp.ne.s32.totalorder %s119, %s122
      %p128 = scmp.eq.s32.totalorder %s23, 0
      %p129 = por %p127, %p128
      %p130 = scmp.ne.s32.totalorder %s119, %s122
      %p131 = scmp.eq.s32.totalorder %s28, 1
      %p132 = por %p130, %p131
      %p133 = scmp.ne.s32.totalorder %s122, %s123
      %p134 = scmp.eq.s32.totalorder %s28, 0
      %p135 = por %p133, %p134
      %p136 = scmp.ne.s32.totalorder %s122, %s123
      %p137 = scmp.eq.s32.totalorder %s29, 1
      %p138 = por %p136, %p137
      %p140 = scmp.ne.s32.totalorder %s123, %s139
      %p141 = scmp.eq.s32.totalorder %s29, 0
      %p142 = por %p140, %p141
      %s143 = ssub.s32 %s30, %s42
      %s144 = ssub.s32 %s31, %s38
      %s145 = sor.u32 %s143, %s144
      %p146 = scmp.eq.s32.totalorder %s145, 0
      %s148 = sadd.s32 %s147, 1
      %s149 = scalar_select %p146, %s147, %s148
      %p152 = pneg %p146
      %p153 = scmp.eq.s32.totalorder %s23, 1
      %p154 = por %p152, %p153
      %p155 = scmp.ne.s32.totalorder %s147, %s150
      %p156 = scmp.eq.s32.totalorder %s23, 0
      %p157 = por %p155, %p156
      %p158 = scmp.ne.s32.totalorder %s147, %s150
      %p159 = scmp.eq.s32.totalorder %s28, 1
      %p160 = por %p158, %p159
      %p161 = scmp.ne.s32.totalorder %s150, %s151
      %p162 = scmp.eq.s32.totalorder %s28, 0
      %p163 = por %p161, %p162
      %p164 = scmp.ne.s32.totalorder %s150, %s151
      %p165 = scmp.eq.s32.totalorder %s29, 1
      %p166 = por %p164, %p165
      %p168 = scmp.ne.s32.totalorder %s151, %s167
      %p169 = scmp.eq.s32.totalorder %s29, 0
      %p170 = por %p168, %p169
      %s171 = ssub.s32 %s30, %s42
      %s172 = ssub.s32 %s31, %s38
      %s173 = sor.u32 %s171, %s172
      %p174 = scmp.eq.s32.totalorder %s173, 0
      %s176 = sadd.s32 %s175, 1
      %s177 = scalar_select %p174, %s175, %s176
      %p180 = pneg %p174
      %p181 = scmp.eq.s32.totalorder %s23, 1
      %p182 = por %p180, %p181
      %p183 = scmp.ne.s32.totalorder %s175, %s178
      %p184 = scmp.eq.s32.totalorder %s23, 0
      %p185 = por %p183, %p184
      %p186 = scmp.ne.s32.totalorder %s175, %s178
      %p187 = scmp.eq.s32.totalorder %s28, 1
      %p188 = por %p186, %p187
      %p189 = scmp.ne.s32.totalorder %s178, %s179
      %p190 = scmp.eq.s32.totalorder %s28, 0
      %p191 = por %p189, %p190
      %p192 = scmp.ne.s32.totalorder %s178, %s179
      %p193 = scmp.eq.s32.totalorder %s29, 1
      %p194 = por %p192, %p193
      %p196 = scmp.ne.s32.totalorder %s179, %s195
      %p197 = scmp.eq.s32.totalorder %s29, 0
      %p198 = por %p196, %p197
      %p199 = scmp.le.s32.totalorder 1, %s23
      %p200 = scmp.lt.s32.totalorder %s23, 3
      %p201 = pnand %p199, %p200
      %p202 = pneg %p201
      // Predicated region
      $region9: #{tpu_custom_call.1} parent=5 // pred_check
        _
      $region10: #{tpu_custom_call.1} parent=5 // pred_check_branch
        %204 = sbr.rel (%p201) target = $region12
      $region11: #{tpu_custom_call.1} parent=5 // pred_region
        %s205 = ssub.s32 %s23, 1
      $region12: #{tpu_custom_call.1} parent=5 // pred_fallthru
        _
      %p206 = scmp.lt.s32.totalorder %s23, 2
      // Predicated region
      $region13: #{tpu_custom_call.1} parent=5 // pred_check
        %p207 = pneg %p206
      $region14: #{tpu_custom_call.1} parent=5 // pred_check_branch
        %209 = sbr.rel (%p207) target = $region16
      $region15: #{tpu_custom_call.1} parent=5 // pred_region
        // Predicated region
        $region17: #{tpu_custom_call.1} parent=15 // pred_check
          %p210 = pneg %p57
        $region18: #{tpu_custom_call.1} parent=15 // pred_check_branch
          %212 = sbr.rel (%p210) target = $region20
        $region19: #{tpu_custom_call.1} parent=15 // pred_region
          %s213 = sand.u32 %s47, 1
          %s214 = scalar_lea.sflag [#allocation3], %s213
          %s215 = sand.u32 %s47, 1
          %s216 = smul.addr %s215, 48
          %s217 = scalar_lea.vmem [#allocation2], %s216
          %s218 = smul.u32 2, %s31
          %s220 = ssub.s32 768, 768
          %221 = vsyncadd %s214, %s220
          %s222 = smul.addr %s30, 6
          %s223 = sadd.s32 %s218, %s222
          %s224 = smul.addr %s223, 128
          %s225 = scalar_lea.hbm %s0, %s224
          %s226 = sshll.u32 %s217, 4
          %s227 = int_to_ptr.vmem [resolvable:$true] %s226
          %232 = dma.hbm_to_vmem [thread:$0]  %s225, 768, %s227, %s214, 128, 128, 8
        $region20: #{tpu_custom_call.1} parent=15 // pred_fallthru
          _
        // Predicated region
        $region21: #{tpu_custom_call.1} parent=15 // pred_check
          %p233 = pneg %p93
        $region22: #{tpu_custom_call.1} parent=15 // pred_check_branch
          %235 = sbr.rel (%p233) target = $region24
        $region23: #{tpu_custom_call.1} parent=15 // pred_region
          %s236 = sand.u32 %s23, 1
          %s237 = scalar_lea.sflag [#allocation6], %s236
          %s238 = sand.u32 %s83, 1
          %s239 = smul.addr %s238, 24
          %s240 = scalar_lea.vmem [#allocation5], %s239
          %s241 = smul.u32 %s31, 2
          %s242 = ssub.s32 %s241, 1
          %p243 = scmp.gt.s32.totalorder %s242, 0
          %s244 = scalar_select %p243, %s242, 0
          %s246 = ssub.s32 384, 384
          %247 = vsyncadd %s237, %s246
          %s248 = smul.addr %s30, 6
          %s249 = sadd.s32 %s244, %s248
          %s250 = smul.addr %s249, 128
          %s251 = scalar_lea.hbm %s1, %s250
          %s252 = sshll.u32 %s240, 4
          %s253 = int_to_ptr.vmem [resolvable:$true] %s252
          %258 = dma.hbm_to_vmem [thread:$0]  %s251, 384, %s253, %s237, 256, 128, 8
        $region24: #{tpu_custom_call.1} parent=15 // pred_fallthru
          _
        // Predicated region
        $region25: #{tpu_custom_call.1} parent=15 // pred_check
          %p259 = pneg %p129
        $region26: #{tpu_custom_call.1} parent=15 // pred_check_branch
          %261 = sbr.rel (%p259) target = $region28
        $region27: #{tpu_custom_call.1} parent=15 // pred_region
          %s262 = sand.u32 %s23, 1
          %s263 = scalar_lea.sflag [#allocation6], %s262
          %s264 = sand.u32 %s119, 1
          %s265 = smul.addr %s264, 24
          %s266 = scalar_lea.vmem [#allocation7], %s265
          %s267 = sadd.s32 %s31, 1
          %s268 = smul.u32 %s267, 2
          %p269 = scmp.lt.s32.totalorder %s268, 1
          %s270 = scalar_select %p269, %s268, 1
          %s272 = ssub.s32 384, 384
          %273 = vsyncadd %s263, %s272
          %s274 = smul.addr %s30, 6
          %s275 = sadd.s32 %s270, %s274
          %s276 = smul.addr %s275, 128
          %s277 = scalar_lea.hbm %s2, %s276
          %s278 = sshll.u32 %s266, 4
          %s279 = int_to_ptr.vmem [resolvable:$true] %s278
          %284 = dma.hbm_to_vmem [thread:$0]  %s277, 384, %s279, %s263, 256, 128, 8
        $region28: #{tpu_custom_call.1} parent=15 // pred_fallthru
          _
      $region16: #{tpu_custom_call.1} parent=5 // pred_fallthru
        _
      %p285 = scmp.le.s32.totalorder 1, %s23
      %p286 = scmp.lt.s32.totalorder %s23, 3
      %p287 = pnand %p285, %p286
      %p288 = pneg %p287
      // Predicated region
      $region29: #{tpu_custom_call.1} parent=5 // pred_check
        _
      $region30: #{tpu_custom_call.1} parent=5 // pred_check_branch
        %290 = sbr.rel (%p287) target = $region32
      $region31: #{tpu_custom_call.1} parent=5 // pred_region
        %s291 = ssub.s32 %s23, 1
        %s292 = sand.u32 %s50, 1
        %s293 = scalar_lea.sflag [#allocation3], %s292
        %s294 = sand.u32 %s50, 1
        %s295 = smul.addr %s294, 48
        %s296 = scalar_lea.vmem [#allocation2], %s295
        // Predicated region
        $region33: #{tpu_custom_call.1} parent=31 // pred_check
          %p297 = pneg %p63
        $region34: #{tpu_custom_call.1} parent=31 // pred_check_branch
          %299 = sbr.rel (%p297) target = $region36
        $region35: #{tpu_custom_call.1} parent=31 // pred_region
          %300 = dma.done %s293, 768
        $region36: #{tpu_custom_call.1} parent=31 // pred_fallthru
          _
        %s301 = sand.u32 %s28, 1
        %s302 = scalar_lea.sflag [#allocation6], %s301
        %s303 = sand.u32 %s86, 1
        %s304 = smul.addr %s303, 24
        %s305 = scalar_lea.vmem [#allocation5], %s304
        // Predicated region
        $region37: #{tpu_custom_call.1} parent=31 // pred_check
          %p306 = pneg %p99
        $region38: #{tpu_custom_call.1} parent=31 // pred_check_branch
          %308 = sbr.rel (%p306) target = $region40
        $region39: #{tpu_custom_call.1} parent=31 // pred_region
          %309 = dma.done %s302, 384
        $region40: #{tpu_custom_call.1} parent=31 // pred_fallthru
          _
        %s310 = sand.u32 %s28, 1
        %s311 = scalar_lea.sflag [#allocation6], %s310
        %s312 = sand.u32 %s122, 1
        %s313 = smul.addr %s312, 24
        %s314 = scalar_lea.vmem [#allocation7], %s313
        // Predicated region
        $region41: #{tpu_custom_call.1} parent=31 // pred_check
          %p315 = pneg %p135
        $region42: #{tpu_custom_call.1} parent=31 // pred_check_branch
          %317 = sbr.rel (%p315) target = $region44
        $region43: #{tpu_custom_call.1} parent=31 // pred_region
          %318 = dma.done %s311, 384
        $region44: #{tpu_custom_call.1} parent=31 // pred_fallthru
          _
        %s319 = sand.u32 %s50, 1
        %s320 = scalar_lea.sflag [#allocation3], %s319
        %s321 = sand.u32 %s50, 1
        %s322 = smul.addr %s321, 48
        %s323 = scalar_lea.vmem [#allocation2], %s322
        %p324 = pneg %p63
        %p325 = pneg %p60
        %s326 = sand.u32 %s28, 1
        %s327 = scalar_lea.sflag [#allocation6], %s326
        %s328 = sand.u32 %s86, 1
        %s329 = smul.addr %s328, 24
        %s330 = scalar_lea.vmem [#allocation5], %s329
        %p331 = pneg %p99
        %p332 = pneg %p96
        %s333 = sand.u32 %s28, 1
        %s334 = scalar_lea.sflag [#allocation6], %s333
        %s335 = sand.u32 %s122, 1
        %s336 = smul.addr %s335, 24
        %s337 = scalar_lea.vmem [#allocation7], %s336
        %p338 = pneg %p135
        %p339 = pneg %p132
        %p340 = pneg %p163
        %p341 = pneg %p160
        %s342 = sand.u32 %s150, 1
        %s343 = scalar_lea.sflag [#allocation4], %s342
        %s344 = sand.u32 %s150, 1
        %s345 = smul.addr %s344, 16
        %s346 = scalar_lea.vmem [#allocation8], %s345
        %p347 = pneg %p191
        %p348 = pneg %p188
        %s349 = sand.u32 %s178, 1
        %s350 = scalar_lea.sflag [#allocation10], %s349
        %s351 = sand.u32 %s178, 1
        %s352 = smul.addr %s351, 16
        %s353 = scalar_lea.vmem [#allocation9], %s352
        %s354 = smul.u32 2, %s33
        %s355 = smul.u32 %s33, 2
        %s356 = ssub.s32 %s355, 1
        %p357 = scmp.gt.s32.totalorder %s356, 0
        %s358 = scalar_select %p357, %s356, 0
        %s359 = sadd.s32 %s33, 1
        %s360 = smul.u32 %s359, 2
        %p361 = scmp.lt.s32.totalorder %s360, 1
        %s362 = scalar_select %p361, %s360, 1
        %s363 = smul.u32 2, %s33
        %s364 = smul.u32 2, %s33
        %p365 = scmp.gt.s32.totalorder %s33, 0
        %s366 = scalar_select %p365, 1, 0
        %s367 = scvt.s32.f32 %s366
        %p368 = scmp.lt.s32.totalorder %s33, 0
        %s369 = scalar_select %p368, 1, 0
        %s370 = scvt.s32.f32 %s369
        %v371 = vlaneseq
        %v372 = vshrl.u32 %v371, 7
        %v373 = vadd.s32 %v372, 8
        %vm374 = vcmp.eq.s32.totalorder %v372, 0
        %vm375 = vcmp.eq.s32.totalorder %v373, 0
        %vm376 = vcmp.eq.s32.totalorder %v372, 15
        %vm377 = vcmp.eq.s32.totalorder %v373, 15
        %v378 = vlaneseq
        %v379 = vand.u32 %v378, 127
        %vm380 = vcmp.ne.s32.totalorder %v379, 0
        %v381 = vsel %vm380, 1, 0
        %v382 = vcvt.s32.f32 %v381
        %vm383 = vcmp.ne.s32.totalorder %v379, 127
        %v384 = vsel %vm383, 1, 0
        %v385 = vcvt.s32.f32 %v384
        %v386 = vld [vmem:[%s296] sm:$0xff]
        %v387 = vld [vmem:[%s296 + $0x8] sm:$0xff]
        %v388 = vld [vmem:[%s305 + $0x7] sm:$0x1]
        %v389 = vstv %s367
        %v390 = vmul.f32 %v388, %v389
        %v391 = vld [vmem:[%s314] sm:$0x1]
        %v392 = vstv %s370
        %v393 = vmul.f32 %v391, %v392
        %v394 = vrot.slane %v386, 7
        %v395 = vrot.slane %v387, 7
        %vm396 = vcmp.lt.s32.totalorder %v372, 1
        %v397 = vsel %vm396, %v394, %v395
        %v398 = vsel %vm396, %v395, %v394
        %v399 = vsel %vm374, 1, 0
        %v400 = vsel %vm375, 1, 0
        %vm401 = vcmp.eq.s32.totalorder %v399, 1
        %vm402 = vcmp.eq.s32.totalorder %v400, 1
        %v403 = vlaneseq
        %v404 = vshrl.u32 %v403, 7
        %v405 = vsub.s32 0, %v404
        %v406 = vrot.slane %v390, %v405
        %v407 = vsel %vm401, %v406, %v398
        %v408 = vsel %vm402, %v406, %v397
        %v409 = vrot.slane %v386, 1
        %v410 = vrot.slane %v387, 1
        %vm411 = vcmp.lt.s32.totalorder %v372, 7
        %v412 = vsel %vm411, %v409, %v410
        %v413 = vsel %vm411, %v410, %v409
        %v414 = vsel %vm376, 1, 0
        %v415 = vsel %vm377, 1, 0
        %vm416 = vcmp.eq.s32.totalorder %v414, 1
        %vm417 = vcmp.eq.s32.totalorder %v415, 1
        %v418 = vlaneseq
        %v419 = vshrl.u32 %v418, 7
        %v420 = vsub.s32 0, %v419
        %v421 = vrot.slane %v393, %v420
        %v422 = vsel %vm416, %v421, %v412
        %v423 = vsel %vm417, %v421, %v413
        %v424 = vmul.f32 %v386, 2.0
        %v425 = vmul.f32 %v387, 2.0
        %v426 = vadd.f32 %v407, %v424
        %v427 = vadd.f32 %v408, %v425
        %v428 = vadd.f32 %v426, %v422
        %v429 = vadd.f32 %v427, %v423
        %v430 = vsub.f32 %v422, %v407
        %v431 = vsub.f32 %v423, %v408
        %432 = vrot.lane.b32.xlu0 %v428, 127
        %v433 = vpop.permute.xlu0 %432
        %434 = vrot.lane.b32.xlu0 %v429, 127
        %v435 = vpop.permute.xlu0 %434
        %v436 = vmul.f32 %v433, %v385
        %v437 = vmul.f32 %v435, %v385
        %438 = vrot.lane.b32.xlu0 %v428, 1
        %v439 = vpop.permute.xlu0 %438
        %440 = vrot.lane.b32.xlu0 %v429, 1
        %v441 = vpop.permute.xlu0 %440
        %v442 = vmul.f32 %v439, %v382
        %v443 = vmul.f32 %v441, %v382
        %444 = vrot.lane.b32.xlu0 %v430, 127
        %v445 = vpop.permute.xlu0 %444
        %446 = vrot.lane.b32.xlu0 %v431, 127
        %v447 = vpop.permute.xlu0 %446
        %v448 = vmul.f32 %v445, %v385
        %v449 = vmul.f32 %v447, %v385
        %450 = vrot.lane.b32.xlu0 %v430, 1
        %v451 = vpop.permute.xlu0 %450
        %452 = vrot.lane.b32.xlu0 %v431, 1
        %v453 = vpop.permute.xlu0 %452
        %v454 = vmul.f32 %v451, %v382
        %v455 = vmul.f32 %v453, %v382
        %v456 = vsub.f32 %v436, %v442
        %v457 = vsub.f32 %v437, %v443
        %v458 = vmul.f32 %v430, 2.0
        %v459 = vmul.f32 %v431, 2.0
        %v460 = vadd.f32 %v454, %v458
        %v461 = vadd.f32 %v455, %v459
        %v462 = vadd.f32 %v460, %v448
        %v463 = vadd.f32 %v461, %v449
        %v464 = vmul.f32 %v456, %v456
        %v465 = vmul.f32 %v457, %v457
        %v466 = vmul.f32 %v462, %v462
        %v467 = vmul.f32 %v463, %v463
        %v468 = vadd.f32 %v464, %v466
        %v469 = vadd.f32 %v465, %v467
        %v470 = vrsqrt.pop %v468
        %v471 = vmul.f32 %v468, %v470
        %vm472 = vcmp.eq.f32.partialorder %v468, inf
        %v473 = vsel %vm472, %v468, %v471
        %vm474 = vcmp.eq.f32.partialorder %v468, 0.0
        %v475 = vand.u32 %v468, 2147483648
        %v476 = vsel %vm474, %v475, %v473
        %v477 = vrsqrt.pop %v469
        %v478 = vmul.f32 %v469, %v477
        %vm479 = vcmp.eq.f32.partialorder %v469, inf
        %v480 = vsel %vm479, %v469, %v478
        %vm481 = vcmp.eq.f32.partialorder %v469, 0.0
        %v482 = vand.u32 %v469, 2147483648
        %v483 = vsel %vm481, %v482, %v480
        %v484 = vadd.f32 %v476, 0.0
        %v485 = vadd.f32 %v483, 0.0
        %v486 = vadd.f32 %v456, 0.0
        %v487 = vadd.f32 %v457, 0.0
        %v488 = vadd.f32 %v462, 0.0
        %v489 = vadd.f32 %v463, 0.0
        %s490 = scalar_lea.vmem %s296, 16 [#allocation2]
        %v491 = vld [vmem:[%s490] sm:$0xff]
        %v492 = vld [vmem:[%s490 + $0x8] sm:$0xff]
        %s493 = scalar_lea.vmem %s305, 8 [#allocation5]
        %v494 = vld [vmem:[%s493 + $0x7] sm:$0x1]
        %v495 = vmul.f32 %v494, %v389
        %s496 = scalar_lea.vmem %s314, 8 [#allocation7]
        %v497 = vld [vmem:[%s496] sm:$0x1]
        %v498 = vmul.f32 %v497, %v392
        %v499 = vrot.slane %v491, 7
        %v500 = vrot.slane %v492, 7
        %v501 = vsel %vm396, %v499, %v500
        %v502 = vsel %vm396, %v500, %v499
        %v503 = vlaneseq
        %v504 = vshrl.u32 %v503, 7
        %v505 = vsub.s32 0, %v504
        %v506 = vrot.slane %v495, %v505
        %v507 = vsel %vm401, %v506, %v502
        %v508 = vsel %vm402, %v506, %v501
        %v509 = vrot.slane %v491, 1
        %v510 = vrot.slane %v492, 1
        %v511 = vsel %vm411, %v509, %v510
        %v512 = vsel %vm411, %v510, %v509
        %v513 = vlaneseq
        %v514 = vshrl.u32 %v513, 7
        %v515 = vsub.s32 0, %v514
        %v516 = vrot.slane %v498, %v515
        %v517 = vsel %vm416, %v516, %v511
        %v518 = vsel %vm417, %v516, %v512
        %v519 = vmul.f32 %v491, 2.0
        %v520 = vmul.f32 %v492, 2.0
        %v521 = vadd.f32 %v507, %v519
        %v522 = vadd.f32 %v508, %v520
        %v523 = vadd.f32 %v521, %v517
        %v524 = vadd.f32 %v522, %v518
        %v525 = vsub.f32 %v517, %v507
        %v526 = vsub.f32 %v518, %v508
        %527 = vrot.lane.b32.xlu0 %v523, 127
        %v528 = vpop.permute.xlu0 %527
        %529 = vrot.lane.b32.xlu0 %v524, 127
        %v530 = vpop.permute.xlu0 %529
        %v531 = vmul.f32 %v528, %v385
        %v532 = vmul.f32 %v530, %v385
        %533 = vrot.lane.b32.xlu0 %v523, 1
        %v534 = vpop.permute.xlu0 %533
        %535 = vrot.lane.b32.xlu0 %v524, 1
        %v536 = vpop.permute.xlu0 %535
        %v537 = vmul.f32 %v534, %v382
        %v538 = vmul.f32 %v536, %v382
        %539 = vrot.lane.b32.xlu0 %v525, 127
        %v540 = vpop.permute.xlu0 %539
        %541 = vrot.lane.b32.xlu0 %v526, 127
        %v542 = vpop.permute.xlu0 %541
        %v543 = vmul.f32 %v540, %v385
        %v544 = vmul.f32 %v542, %v385
        %545 = vrot.lane.b32.xlu0 %v525, 1
        %v546 = vpop.permute.xlu0 %545
        %547 = vrot.lane.b32.xlu0 %v526, 1
        %v548 = vpop.permute.xlu0 %547
        %v549 = vmul.f32 %v546, %v382
        %v550 = vmul.f32 %v548, %v382
        %v551 = vsub.f32 %v531, %v537
        %v552 = vsub.f32 %v532, %v538
        %v553 = vmul.f32 %v525, 2.0
        %v554 = vmul.f32 %v526, 2.0
        %v555 = vadd.f32 %v549, %v553
        %v556 = vadd.f32 %v550, %v554
        %v557 = vadd.f32 %v555, %v543
        %v558 = vadd.f32 %v556, %v544
        %v559 = vmul.f32 %v551, %v551
        %v560 = vmul.f32 %v552, %v552
        %v561 = vmul.f32 %v557, %v557
        %v562 = vmul.f32 %v558, %v558
        %v563 = vadd.f32 %v559, %v561
        %v564 = vadd.f32 %v560, %v562
        %v565 = vrsqrt.pop %v563
        %v566 = vmul.f32 %v563, %v565
        %vm567 = vcmp.eq.f32.partialorder %v563, inf
        %v568 = vsel %vm567, %v563, %v566
        %vm569 = vcmp.eq.f32.partialorder %v563, 0.0
        %v570 = vand.u32 %v563, 2147483648
        %v571 = vsel %vm569, %v570, %v568
        %v572 = vrsqrt.pop %v564
        %v573 = vmul.f32 %v564, %v572
        %vm574 = vcmp.eq.f32.partialorder %v564, inf
        %v575 = vsel %vm574, %v564, %v573
        %vm576 = vcmp.eq.f32.partialorder %v564, 0.0
        %v577 = vand.u32 %v564, 2147483648
        %v578 = vsel %vm576, %v577, %v575
        %v579 = vadd.f32 %v484, %v571
        %v580 = vadd.f32 %v485, %v578
        %v581 = vadd.f32 %v486, %v551
        %v582 = vadd.f32 %v487, %v552
        %v583 = vadd.f32 %v488, %v557
        %v584 = vadd.f32 %v489, %v558
        %s585 = scalar_lea.vmem %s296, 32 [#allocation2]
        %v586 = vld [vmem:[%s585] sm:$0xff]
        %v587 = vld [vmem:[%s585 + $0x8] sm:$0xff]
        %s588 = scalar_lea.vmem %s305, 16 [#allocation5]
        %v589 = vld [vmem:[%s588 + $0x7] sm:$0x1]
        %v590 = vmul.f32 %v589, %v389
        %s591 = scalar_lea.vmem %s314, 16 [#allocation7]
        %v592 = vld [vmem:[%s591] sm:$0x1]
        %v593 = vmul.f32 %v592, %v392
        %v594 = vrot.slane %v586, 7
        %v595 = vrot.slane %v587, 7
        %v596 = vsel %vm396, %v594, %v595
        %v597 = vsel %vm396, %v595, %v594
        %v598 = vlaneseq
        %v599 = vshrl.u32 %v598, 7
        %v600 = vsub.s32 0, %v599
        %v601 = vrot.slane %v590, %v600
        %v602 = vsel %vm401, %v601, %v597
        %v603 = vsel %vm402, %v601, %v596
        %v604 = vrot.slane %v586, 1
        %v605 = vrot.slane %v587, 1
        %v606 = vsel %vm411, %v604, %v605
        %v607 = vsel %vm411, %v605, %v604
        %v608 = vlaneseq
        %v609 = vshrl.u32 %v608, 7
        %v610 = vsub.s32 0, %v609
        %v611 = vrot.slane %v593, %v610
        %v612 = vsel %vm416, %v611, %v606
        %v613 = vsel %vm417, %v611, %v607
        %v614 = vmul.f32 %v586, 2.0
        %v615 = vmul.f32 %v587, 2.0
        %v616 = vadd.f32 %v602, %v614
        %v617 = vadd.f32 %v603, %v615
        %v618 = vadd.f32 %v616, %v612
        %v619 = vadd.f32 %v617, %v613
        %v620 = vsub.f32 %v612, %v602
        %v621 = vsub.f32 %v613, %v603
        %622 = vrot.lane.b32.xlu0 %v618, 127
        %v623 = vpop.permute.xlu0 %622
        %624 = vrot.lane.b32.xlu0 %v619, 127
        %v625 = vpop.permute.xlu0 %624
        %v626 = vmul.f32 %v623, %v385
        %v627 = vmul.f32 %v625, %v385
        %628 = vrot.lane.b32.xlu0 %v618, 1
        %v629 = vpop.permute.xlu0 %628
        %630 = vrot.lane.b32.xlu0 %v619, 1
        %v631 = vpop.permute.xlu0 %630
        %v632 = vmul.f32 %v629, %v382
        %v633 = vmul.f32 %v631, %v382
        %634 = vrot.lane.b32.xlu0 %v620, 127
        %v635 = vpop.permute.xlu0 %634
        %636 = vrot.lane.b32.xlu0 %v621, 127
        %v637 = vpop.permute.xlu0 %636
        %v638 = vmul.f32 %v635, %v385
        %v639 = vmul.f32 %v637, %v385
        %640 = vrot.lane.b32.xlu0 %v620, 1
        %v641 = vpop.permute.xlu0 %640
        %642 = vrot.lane.b32.xlu0 %v621, 1
        %v643 = vpop.permute.xlu0 %642
        %v644 = vmul.f32 %v641, %v382
        %v645 = vmul.f32 %v643, %v382
        %v646 = vsub.f32 %v626, %v632
        %v647 = vsub.f32 %v627, %v633
        %v648 = vmul.f32 %v620, 2.0
        %v649 = vmul.f32 %v621, 2.0
        %v650 = vadd.f32 %v644, %v648
        %v651 = vadd.f32 %v645, %v649
        %v652 = vadd.f32 %v650, %v638
        %v653 = vadd.f32 %v651, %v639
        %v654 = vmul.f32 %v646, %v646
        %v655 = vmul.f32 %v647, %v647
        %v656 = vmul.f32 %v652, %v652
        %v657 = vmul.f32 %v653, %v653
        %v658 = vadd.f32 %v654, %v656
        %v659 = vadd.f32 %v655, %v657
        %v660 = vrsqrt.pop %v658
        %v661 = vmul.f32 %v658, %v660
        %vm662 = vcmp.eq.f32.partialorder %v658, inf
        %v663 = vsel %vm662, %v658, %v661
        %vm664 = vcmp.eq.f32.partialorder %v658, 0.0
        %v665 = vand.u32 %v658, 2147483648
        %v666 = vsel %vm664, %v665, %v663
        %v667 = vrsqrt.pop %v659
        %v668 = vmul.f32 %v659, %v667
        %vm669 = vcmp.eq.f32.partialorder %v659, inf
        %v670 = vsel %vm669, %v659, %v668
        %vm671 = vcmp.eq.f32.partialorder %v659, 0.0
        %v672 = vand.u32 %v659, 2147483648
        %v673 = vsel %vm671, %v672, %v670
        %v674 = vadd.f32 %v579, %v666
        %v675 = vadd.f32 %v580, %v673
        %v676 = vadd.f32 %v581, %v646
        %v677 = vadd.f32 %v582, %v647
        %v678 = vadd.f32 %v583, %v652
        %v679 = vadd.f32 %v584, %v653
        %v680 = vand.u32 2147483647, %v676
        %v681 = vand.u32 2147483647, %v677
        %v682 = vand.u32 2147483647, %v678
        %v683 = vand.u32 2147483647, %v679
        %v684 = vmul.f32 %v680, 0.41421357
        %v685 = vmul.f32 %v681, 0.41421357
        %vm686 = vcmp.le.f32.partialorder %v682, %v684
        %vm687 = vcmp.le.f32.partialorder %v683, %v685
        %v688 = vmul.f32 %v680, 2.4142134
        %v689 = vmul.f32 %v681, 2.4142134
        %vm690 = vcmp.ge.f32.partialorder %v682, %v688
        %vm691 = vcmp.ge.f32.partialorder %v683, %v689
        %v692 = vsel %vm690, 90.0, 45.0
        %v693 = vsel %vm691, 90.0, 45.0
        %v694 = vsel %vm686, 0.0, %v692
        %v695 = vsel %vm687, 0.0, %v693
        %vm696 = vcmp.ge.f32.partialorder %v678, 0.0
        %vm697 = vcmp.ge.f32.partialorder %v679, 0.0
        %v698 = vsel %vm696, 1.0, -1.0
        %v699 = vsel %vm697, 1.0, -1.0
        %vm700 = vcmp.ge.f32.partialorder %v676, 0.0
        %vm701 = vcmp.ge.f32.partialorder %v677, 0.0
        %v702 = vmul.f32 %v698, %v694
        %v703 = vmul.f32 %v699, %v695
        %v704 = vsub.f32 180.0, %v694
        %v705 = vsub.f32 180.0, %v695
        %v706 = vmul.f32 %v698, %v704
        %v707 = vmul.f32 %v699, %v705
        %v708 = vsel %vm700, %v702, %v706
        %v709 = vsel %vm701, %v703, %v707
        %710 = vst [vmem:[%s346] sm:$0xff] %v674
        %711 = vst [vmem:[%s346 + $0x8] sm:$0xff] %v675
        %712 = vst [vmem:[%s353] sm:$0xff] %v708
        %713 = vst [vmem:[%s353 + $0x8] sm:$0xff] %v709
        %s714 = sand.u32 %s150, 1
        %s715 = scalar_lea.sflag [#allocation4], %s714
        %s716 = sand.u32 %s150, 1
        %s717 = smul.addr %s716, 16
        %s718 = scalar_lea.vmem [#allocation8], %s717
        %s719 = sand.u32 %s178, 1
        %s720 = scalar_lea.sflag [#allocation10], %s719
        %s721 = sand.u32 %s178, 1
        %s722 = smul.addr %s721, 16
        %s723 = scalar_lea.vmem [#allocation9], %s722
        // Predicated region
        $region45: #{tpu_custom_call.1} parent=31 // pred_check
          %p724 = pneg %p160
        $region46: #{tpu_custom_call.1} parent=31 // pred_check_branch
          %726 = sbr.rel (%p724) target = $region48
        $region47: #{tpu_custom_call.1} parent=31 // pred_region
          %s727 = smul.u32 2, %s33
          %s729 = ssub.s32 256, 256
          %730 = vsyncadd %s715, %s729
          %s731 = smul.addr %s32, 2
          %s732 = sadd.s32 %s727, %s731
          %s733 = smul.addr %s732, 128
          %s734 = scalar_lea.hbm %s3, %s733
          %s735 = sshll.u32 %s718, 4
          %s736 = int_to_ptr.vmem [resolvable:$true] %s735
          %741 = dma.vmem_to_hbm [thread:$0]  %s736, 256, %s734, %s715, 128, 128, 8
        $region48: #{tpu_custom_call.1} parent=31 // pred_fallthru
          _
        // Predicated region
        $region49: #{tpu_custom_call.1} parent=31 // pred_check
          %p742 = pneg %p188
        $region50: #{tpu_custom_call.1} parent=31 // pred_check_branch
          %744 = sbr.rel (%p742) target = $region52
        $region51: #{tpu_custom_call.1} parent=31 // pred_region
          %s745 = smul.u32 2, %s33
          %s747 = ssub.s32 256, 256
          %748 = vsyncadd %s720, %s747
          %s749 = smul.addr %s32, 2
          %s750 = sadd.s32 %s745, %s749
          %s751 = smul.addr %s750, 128
          %s752 = scalar_lea.hbm %s4, %s751
          %s753 = sshll.u32 %s723, 4
          %s754 = int_to_ptr.vmem [resolvable:$true] %s753
          %759 = dma.vmem_to_hbm [thread:$0]  %s754, 256, %s752, %s720, 128, 128, 8
        $region52: #{tpu_custom_call.1} parent=31 // pred_fallthru
          _
      $region32: #{tpu_custom_call.1} parent=5 // pred_fallthru
        _
      %p760 = scmp.le.s32.totalorder 2, %s23
      // Predicated region
      $region53: #{tpu_custom_call.1} parent=5 // pred_check
        %p761 = pneg %p760
      $region54: #{tpu_custom_call.1} parent=5 // pred_check_branch
        %763 = sbr.rel (%p761) target = $region56
      $region55: #{tpu_custom_call.1} parent=5 // pred_region
        %s764 = ssub.s32 %s23, 2
        // Predicated region
        $region57: #{tpu_custom_call.1} parent=55 // pred_check
          %p765 = pneg %p166
        $region58: #{tpu_custom_call.1} parent=55 // pred_check_branch
          %767 = sbr.rel (%p765) target = $region60
        $region59: #{tpu_custom_call.1} parent=55 // pred_region
          %s768 = sand.u32 %s151, 1
          %s769 = scalar_lea.sflag [#allocation4], %s768
          %s770 = sand.u32 %s151, 1
          %s771 = smul.addr %s770, 16
          %s772 = scalar_lea.vmem [#allocation8], %s771
          %773 = dma.done %s769, 256
        $region60: #{tpu_custom_call.1} parent=55 // pred_fallthru
          _
        // Predicated region
        $region61: #{tpu_custom_call.1} parent=55 // pred_check
          %p774 = pneg %p194
        $region62: #{tpu_custom_call.1} parent=55 // pred_check_branch
          %776 = sbr.rel (%p774) target = $region64
        $region63: #{tpu_custom_call.1} parent=55 // pred_region
          %s777 = sand.u32 %s179, 1
          %s778 = scalar_lea.sflag [#allocation10], %s777
          %s779 = sand.u32 %s179, 1
          %s780 = smul.addr %s779, 16
          %s781 = scalar_lea.vmem [#allocation9], %s780
          %782 = dma.done %s778, 256
        $region64: #{tpu_custom_call.1} parent=55 // pred_fallthru
          _
      $region56: #{tpu_custom_call.1} parent=5 // pred_fallthru
        _
    $region6: #{tpu_custom_call.1} parent=1 // loop_footer
      %s27 = sadd.s32 1, %s23
    $region7: #{tpu_custom_call.1} parent=1 // loop_footer_branch
      %22 = sbr.rel target = $region3
    $region8: #{tpu_custom_call.1} parent=1 // loop_exit
      _
    %783 = vsyncpa [#allocation3], 1
    %s784 = scalar_lea.sflag [#allocation3], 1
    %785 = vsyncpa %s784, 1
    %786 = vsyncpa [#allocation6], 1
    %s787 = scalar_lea.sflag [#allocation6], 1
    %788 = vsyncpa %s787, 1
    %789 = vsyncpa [#allocation4], 1
    %s790 = scalar_lea.sflag [#allocation4], 1
    %791 = vsyncpa %s790, 1
    %792 = vsyncpa [#allocation10], 1
    %s793 = scalar_lea.sflag [#allocation10], 1
    %794 = vsyncpa %s793, 1

</llo_original>
